<compile_context>
chip_gen: v6e
topology: v6e:2x2x1
jax: 0.10.0
libtpu: 0.0.40
codegen_flags: <defaults>
</compile_context>

<pallas_src>
import math

import jax
import jax.numpy as jnp
from jax.experimental import pallas as pl
from jax.experimental.pallas import tpu as pltpu

D_IN, D_H1, D_H2, D_OUT = 784, 40, 30, 10

# Row-tile bounds.  4096 rows x 784 feats x 4 B (f32) ~ 12.8 MiB per buffer,
# double-buffered ~25.6 MiB + resident bf16 weights (~65 KiB) + small f32/bf16
# intermediates: fits comfortably under the explicit 48 MiB scoped-VMEM limit on
# every generation (v7x physical VMEM is 64 MiB).
_MAX_BLOCK_B = 4096
_MIN_BLOCK_B = 1024
_VMEM_LIMIT_BYTES = 48 * 1024 * 1024


def _round_up(n, m):
    return (n + m - 1) // m * m


def _cdiv(a, b):
    return -(-a // b)


def _pick_row_tile(batch):
    """Row tile: multiple of 8 sublanes, capped at _MAX_BLOCK_B; for large batches
    shrink so there are >= ~4 grid blocks (megacore sharding + pipeline room) while
    each block stays >= _MIN_BLOCK_B rows so per-step overhead remains amortized."""
    tb = min(_MAX_BLOCK_B, _round_up(batch, 8))
    if batch >= 4 * _MIN_BLOCK_B:
        tb = min(tb, max(_MIN_BLOCK_B, _round_up(_cdiv(batch, 4), 8)))
    return tb


def _mlp_kernel(x_ref, w1_ref, b1_ref, w2_ref, b2_ref, w3_ref, b3_ref, o_ref):
    # x_ref: (TB, 784) in the caller's dtype (typically f32).  Cast to bf16 on the
    # VPU here (hidden under the input DMA) so every MXU matmul is bf16 x bf16.
    x = x_ref[...].astype(jnp.bfloat16)

    # Linear 1 + ReLU   (bf16 x bf16 -> f32 accumulation on the MXU)
    h1 = jnp.dot(x, w1_ref[...], preferred_element_type=jnp.float32) + b1_ref[...]
    h1 = jnp.maximum(h1, 0.0)                                        # (TB, 40) f32

    # Linear 2 + ReLU
    h2 = jnp.dot(h1.astype(jnp.bfloat16), w2_ref[...],
                 preferred_element_type=jnp.float32) + b2_ref[...]
    h2 = jnp.maximum(h2, 0.0)                                        # (TB, 30) f32

    # Linear 3
    logits = jnp.dot(h2.astype(jnp.bfloat16), w3_ref[...],
                     preferred_element_type=jnp.float32) + b3_ref[...]  # (TB, 10) f32

    # Softmax over features (dim=1), numerically stable, f32 math.
    # NOTE: rows are independent.  With ragged edge tiles, rows >= B hold garbage
    # (possibly Inf/NaN after exp) and their stores are masked -- never add a
    # cross-row reduction to this kernel.
    m = jnp.max(logits, axis=1, keepdims=True)
    e = jnp.exp(logits - m)
    denom = jnp.sum(e, axis=1, keepdims=True)
    o_ref[...] = (e * pl.reciprocal(denom, approx=True)).astype(o_ref.dtype)


def prepare_params(params):
    """One-time glue (hoisted out of the per-call path): transpose weights to (in, out)
    and cast to bf16; reshape biases to (1, out) f32 for broadcasting."""
    w1, b1 = params["lin1"]
    w2, b2 = params["lin2"]
    w3, b3 = params["lin3"]
    return {
        "w1t": jnp.asarray(w1.T, jnp.bfloat16), "b1": jnp.asarray(b1, jnp.float32)[None, :],
        "w2t": jnp.asarray(w2.T, jnp.bfloat16), "b2": jnp.asarray(b2, jnp.float32)[None, :],
        "w3t": jnp.asarray(w3.T, jnp.bfloat16), "b3": jnp.asarray(b3, jnp.float32)[None, :],
    }


@jax.jit
def net_forward(x, prepared):
    """x: (B, 784) float (f32 or bf16, passed through untouched).  prepared: prepare_params()."""
    B = x.shape[0]
    TB = _pick_row_tile(B)
    n_blocks = _cdiv(B, TB)          # ragged last block handled by Pallas masking; no pad.

    weight_elems = D_IN * D_H1 + D_H1 * D_H2 + D_H2 * D_OUT
    cost = pl.CostEstimate(
        flops=2 * B * weight_elems,
        transcendentals=B * D_OUT,
        bytes_accessed=B * D_IN * x.dtype.itemsize + B * D_OUT * 4
                       + weight_elems * 2 + (D_H1 + D_H2 + D_OUT) * 4,
    )

    resident = lambda shape: pl.BlockSpec(shape, lambda i: (0, 0))

    out = pl.pallas_call(
        _mlp_kernel,
        out_shape=jax.ShapeDtypeStruct((B, D_OUT), jnp.float32),
        grid=(n_blocks,),
        in_specs=[
            pl.BlockSpec((TB, D_IN), lambda i: (i, 0)),      # streamed x row tiles
            resident(prepared["w1t"].shape), resident(prepared["b1"].shape),
            resident(prepared["w2t"].shape), resident(prepared["b2"].shape),
            resident(prepared["w3t"].shape), resident(prepared["b3"].shape),
        ],
        out_specs=pl.BlockSpec((TB, D_OUT), lambda i: (i, 0)),
        compiler_params=pltpu.CompilerParams(
            dimension_semantics=("parallel",),               # megacore sharding on v7x
            vmem_limit_bytes=_VMEM_LIMIT_BYTES),
        cost_estimate=cost,
    )(x, prepared["w1t"], prepared["b1"], prepared["w2t"], prepared["b2"],
      prepared["w3t"], prepared["b3"])

    return out


def init_params(key):
    """Deterministic init mimicking nn.Linear defaults: U(-1/sqrt(fan_in), +1/sqrt(fan_in))."""
    dims = [("lin1", D_IN, D_H1), ("lin2", D_H1, D_H2), ("lin3", D_H2, D_OUT)]
    params = {}
    for name, fan_in, fan_out in dims:
        key, kw, kb = jax.random.split(key, 3)
        bound = 1.0 / math.sqrt(fan_in)
        w = jax.random.uniform(kw, (fan_out, fan_in), jnp.float32, -bound, bound)
        b = jax.random.uniform(kb, (fan_out,), jnp.float32, -bound, bound)
        params[name] = (w, b)
    return params


def _reference_forward(x, params):
    w1, b1 = params["lin1"]
    w2, b2 = params["lin2"]
    w3, b3 = params["lin3"]
    h = jnp.maximum(x @ w1.T + b1, 0.0)
    h = jnp.maximum(h @ w2.T + b2, 0.0)
    logits = h @ w3.T + b3
    return jax.nn.softmax(logits, axis=1)


def _check(x, params, prepared):
    out = jax.block_until_ready(net_forward(x, prepared))
    ref = _reference_forward(x, params)
    assert out.shape == (x.shape[0], D_OUT)
    # bf16 in-kernel math + approx reciprocal loosen agreement with the f32 reference.
    assert jnp.all(jnp.isfinite(out))
    assert jnp.allclose(out, ref, atol=5e-2, rtol=5e-2)
    assert jnp.allclose(jnp.sum(out, axis=1), 1.0, atol=1e-2)
    return out


if __name__ == "__main__":
    key = jax.random.PRNGKey(0)
    kx, kx2, kx3, kp = jax.random.split(key, 4)

    params = init_params(kp)
    prepared = prepare_params(params)

    # Primary small-shape run (single aligned tile).
    x = jax.random.normal(kx, (8, D_IN), jnp.float32)
    _check(x, params, prepared)

    # Ragged batch (B not a multiple of 8): single tile with masked edge rows, no pad.
    x2 = jax.random.normal(kx2, (37, D_IN), jnp.float32)
    _check(x2, params, prepared)

    # Larger batch: multiple grid blocks + ragged last block, still no wrapper pad/copy.
    x3 = jax.random.normal(kx3, (4100, D_IN), jnp.float32)
    _check(x3, params, prepared)

    print("KERNEL_OK")
</pallas_src>

<mosaic_0001>
module attributes {stable_mosaic.version = 11 : i64} {
  func.func @_mlp_kernel(%arg0: i32, %arg1: memref<8x784xf32, #tpu.memory_space<vmem>>, %arg2: memref<784x40xbf16, #tpu.memory_space<vmem>>, %arg3: memref<1x40xf32, #tpu.memory_space<vmem>>, %arg4: memref<40x30xbf16, #tpu.memory_space<vmem>>, %arg5: memref<1x30xf32, #tpu.memory_space<vmem>>, %arg6: memref<30x10xbf16, #tpu.memory_space<vmem>>, %arg7: memref<1x10xf32, #tpu.memory_space<vmem>>, %arg8: memref<8x10xf32, #tpu.memory_space<vmem>>) attributes {dimension_semantics = [#tpu.dimension_semantics<parallel>], iteration_bounds = array<i64: 1>, scalar_prefetch = 0 : i64, scratch_operands = 0 : i64, tpu.core_type = #tpu.core_type<tc>, window_params = [{transform_indices = @transform_0, window_bounds = array<i64: 8, 784>}, {pipeline_mode = #tpu.pipeline_mode<synchronous>, transform_indices = @transform_1, window_bounds = array<i64: 784, 40>}, {pipeline_mode = #tpu.pipeline_mode<synchronous>, transform_indices = @transform_2, window_bounds = array<i64: 1, 40>}, {pipeline_mode = #tpu.pipeline_mode<synchronous>, transform_indices = @transform_3, window_bounds = array<i64: 40, 30>}, {pipeline_mode = #tpu.pipeline_mode<synchronous>, transform_indices = @transform_4, window_bounds = array<i64: 1, 30>}, {pipeline_mode = #tpu.pipeline_mode<synchronous>, transform_indices = @transform_5, window_bounds = array<i64: 30, 10>}, {pipeline_mode = #tpu.pipeline_mode<synchronous>, transform_indices = @transform_6, window_bounds = array<i64: 1, 10>}, {transform_indices = @transform_7, window_bounds = array<i64: 8, 10>}]} {
    %c0 = arith.constant 0 : index
    %c0_0 = arith.constant 0 : index
    %0 = vector.load %arg1[%c0, %c0_0] : memref<8x784xf32, #tpu.memory_space<vmem>>, vector<8x784xf32>
    %1 = arith.truncf %0 : vector<8x784xf32> to vector<8x784xbf16>
    %c0_1 = arith.constant 0 : index
    %c0_2 = arith.constant 0 : index
    %2 = vector.load %arg2[%c0_1, %c0_2] : memref<784x40xbf16, #tpu.memory_space<vmem>>, vector<784x40xbf16>
    %cst = arith.constant dense<0.000000e+00> : vector<8x40xf32>
    %3 = tpu.matmul %1, %2, %cst {dimension_numbers = #tpu.dot_dimension_numbers<[1], [0], [0], [1], [0, 0, 1, 1], [], []>} : vector<8x784xbf16>, vector<784x40xbf16>, vector<8x40xf32> -> vector<8x40xf32>
    %c0_3 = arith.constant 0 : index
    %c0_4 = arith.constant 0 : index
    %4 = vector.load %arg3[%c0_3, %c0_4] : memref<1x40xf32, #tpu.memory_space<vmem>>, vector<1x40xf32>
    %5 = vector.broadcast %4 : vector<1x40xf32> to vector<8x40xf32>
    %6 = arith.addf %3, %5 : vector<8x40xf32>
    %cst_5 = arith.constant 0.000000e+00 : f32
    %7 = vector.broadcast %cst_5 : f32 to vector<8x40xf32>
    %8 = arith.maximumf %6, %7 : vector<8x40xf32>
    %9 = arith.truncf %8 : vector<8x40xf32> to vector<8x40xbf16>
    %c0_6 = arith.constant 0 : index
    %c0_7 = arith.constant 0 : index
    %10 = vector.load %arg4[%c0_6, %c0_7] : memref<40x30xbf16, #tpu.memory_space<vmem>>, vector<40x30xbf16>
    %cst_8 = arith.constant dense<0.000000e+00> : vector<8x30xf32>
    %11 = tpu.matmul %9, %10, %cst_8 {dimension_numbers = #tpu.dot_dimension_numbers<[1], [0], [0], [1], [0, 0, 1, 1], [], []>} : vector<8x40xbf16>, vector<40x30xbf16>, vector<8x30xf32> -> vector<8x30xf32>
    %c0_9 = arith.constant 0 : index
    %c0_10 = arith.constant 0 : index
    %12 = vector.load %arg5[%c0_9, %c0_10] : memref<1x30xf32, #tpu.memory_space<vmem>>, vector<1x30xf32>
    %13 = vector.broadcast %12 : vector<1x30xf32> to vector<8x30xf32>
    %14 = arith.addf %11, %13 : vector<8x30xf32>
    %cst_11 = arith.constant 0.000000e+00 : f32
    %15 = vector.broadcast %cst_11 : f32 to vector<8x30xf32>
    %16 = arith.maximumf %14, %15 : vector<8x30xf32>
    %17 = arith.truncf %16 : vector<8x30xf32> to vector<8x30xbf16>
    %c0_12 = arith.constant 0 : index
    %c0_13 = arith.constant 0 : index
    %18 = vector.load %arg6[%c0_12, %c0_13] : memref<30x10xbf16, #tpu.memory_space<vmem>>, vector<30x10xbf16>
    %cst_14 = arith.constant dense<0.000000e+00> : vector<8x10xf32>
    %19 = tpu.matmul %17, %18, %cst_14 {dimension_numbers = #tpu.dot_dimension_numbers<[1], [0], [0], [1], [0, 0, 1, 1], [], []>} : vector<8x30xbf16>, vector<30x10xbf16>, vector<8x10xf32> -> vector<8x10xf32>
    %c0_15 = arith.constant 0 : index
    %c0_16 = arith.constant 0 : index
    %20 = vector.load %arg7[%c0_15, %c0_16] : memref<1x10xf32, #tpu.memory_space<vmem>>, vector<1x10xf32>
    %21 = vector.broadcast %20 : vector<1x10xf32> to vector<8x10xf32>
    %22 = arith.addf %19, %21 : vector<8x10xf32>
    %cst_17 = arith.constant dense<0xFF800000> : vector<8xf32>
    %23 = vector.multi_reduction <maximumf>, %22, %cst_17 [1] : vector<8x10xf32> to vector<8xf32>
    %24 = vector.shape_cast %23 : vector<8xf32> to vector<8x1xf32>
    %25 = vector.broadcast %24 : vector<8x1xf32> to vector<8x10xf32>
    %26 = arith.subf %22, %25 : vector<8x10xf32>
    %27 = math.exp %26 : vector<8x10xf32>
    %cst_18 = arith.constant dense<0.000000e+00> : vector<8xf32>
    %28 = vector.multi_reduction <add>, %27, %cst_18 [1] : vector<8x10xf32> to vector<8xf32>
    %29 = vector.shape_cast %28 : vector<8xf32> to vector<8x1xf32>
    %30 = tpu.reciprocal %29 {approx = true} : vector<8x1xf32> -> vector<8x1xf32>
    %31 = vector.broadcast %30 : vector<8x1xf32> to vector<8x10xf32>
    %32 = arith.mulf %27, %31 : vector<8x10xf32>
    %c0_19 = arith.constant 0 : index
    %c0_20 = arith.constant 0 : index
    %33 = vector.load %arg8[%c0_19, %c0_20] : memref<8x10xf32, #tpu.memory_space<vmem>>, vector<8x10xf32>
    tpu.vector_store %arg8[%c0_19, %c0_20], %32 {strides = array<i32>} : memref<8x10xf32, #tpu.memory_space<vmem>>, vector<8x10xf32>,
    return
  }
  func.func @transform_0(%arg0: i32) -> (i32, i32) {
    %c0_i32 = arith.constant 0 : i32
    %c0_i32_0 = arith.constant 0 : i32
    return %arg0, %c0_i32 : i32, i32
  }
  func.func @transform_1(%arg0: i32) -> (i32, i32) {
    %c0_i32 = arith.constant 0 : i32
    %c0_i32_0 = arith.constant 0 : i32
    %c0_i32_1 = arith.constant 0 : i32
    return %c0_i32, %c0_i32_0 : i32, i32
  }
  func.func @transform_2(%arg0: i32) -> (i32, i32) {
    %c0_i32 = arith.constant 0 : i32
    %c0_i32_0 = arith.constant 0 : i32
    %c0_i32_1 = arith.constant 0 : i32
    return %c0_i32, %c0_i32_0 : i32, i32
  }
  func.func @transform_3(%arg0: i32) -> (i32, i32) {
    %c0_i32 = arith.constant 0 : i32
    %c0_i32_0 = arith.constant 0 : i32
    %c0_i32_1 = arith.constant 0 : i32
    return %c0_i32, %c0_i32_0 : i32, i32
  }
  func.func @transform_4(%arg0: i32) -> (i32, i32) {
    %c0_i32 = arith.constant 0 : i32
    %c0_i32_0 = arith.constant 0 : i32
    %c0_i32_1 = arith.constant 0 : i32
    return %c0_i32, %c0_i32_0 : i32, i32
  }
  func.func @transform_5(%arg0: i32) -> (i32, i32) {
    %c0_i32 = arith.constant 0 : i32
    %c0_i32_0 = arith.constant 0 : i32
    %c0_i32_1 = arith.constant 0 : i32
    return %c0_i32, %c0_i32_0 : i32, i32
  }
  func.func @transform_6(%arg0: i32) -> (i32, i32) {
    %c0_i32 = arith.constant 0 : i32
    %c0_i32_0 = arith.constant 0 : i32
    %c0_i32_1 = arith.constant 0 : i32
    return %c0_i32, %c0_i32_0 : i32, i32
  }
  func.func @transform_7(%arg0: i32) -> (i32, i32) {
    %c0_i32 = arith.constant 0 : i32
    %c0_i32_0 = arith.constant 0 : i32
    return %arg0, %c0_i32 : i32, i32
  }
}

</mosaic_0001>

<llo_original>
// kernel: net_forward.1
$region0: #{net_forward.1}
  #allocation0 [shape = 'u32[]', space=smem, size = 0x4, offset = 0x4, fixed_abs, tag = 'smem constant byte address 0x4 - core index']
  #allocation1 [shape = 'u32[144,128]{1,0:T(1,128)}', space=vmem, size = 0x12000, scoped, tag = 'internal scratch']
  %s0 = inlined_call_operand.vmem [shape: f32[8,784], index: 0, kind: input, shape index: {}]
  %s1 = inlined_call_operand.vmem [shape: bf16[784,40], index: 1, kind: input, shape index: {}]
  %s2 = inlined_call_operand.vmem [shape: f32[1,40], index: 2, kind: input, shape index: {}]
  %s3 = inlined_call_operand.vmem [shape: bf16[40,30], index: 3, kind: input, shape index: {}]
  %s4 = inlined_call_operand.vmem [shape: f32[1,30], index: 4, kind: input, shape index: {}]
  %s5 = inlined_call_operand.vmem [shape: bf16[30,10], index: 5, kind: input, shape index: {}]
  %s6 = inlined_call_operand.vmem [shape: f32[1,10], index: 6, kind: input, shape index: {}]
  %s7 = inlined_call_operand.hbm [shape: f32[8,10], index: 7, kind: output, shape index: {}]
  %s8 = sld [smem:[#allocation0]]
  $region38: #{net_forward.1} parent=0
    _
  %s10 = ssub.s32 1, %s8
  %s11 = scalar_select 0, %s10, %s8
  $region1: #{net_forward.1} parent=0
    #allocation2 [shape = 'u8[4096]{0}', space=vmem, size = 0x1000, scoped, tag = 'output window, operand 0, single buffered']
    #allocation3 [shape = 's32[1]{0}', space=sflag, size = 0x4, scoped, tag = 'scoped memory for net_forward.1']
    %12 = vsyncpa [#allocation3], 0
    // Predicated region
    $region2: #{net_forward.1} parent=1 // pred_check
      _
    $region3: #{net_forward.1} parent=1 // pred_check_branch
      %14 = sbr.rel (0) target = $region5
    $region4: #{net_forward.1} parent=1 // pred_region
      _
    $region5: #{net_forward.1} parent=1 // pred_fallthru
      _
    // Predicated region
    $region6: #{net_forward.1} parent=1 // pred_check
      _
    $region7: #{net_forward.1} parent=1 // pred_check_branch
      %16 = sbr.rel (0) target = $region9
    $region8: #{net_forward.1} parent=1 // pred_region
      _
    $region9: #{net_forward.1} parent=1 // pred_fallthru
      _
    // Predicated region
    $region10: #{net_forward.1} parent=1 // pred_check
      _
    $region11: #{net_forward.1} parent=1 // pred_check_branch
      %18 = sbr.rel (0) target = $region13
    $region12: #{net_forward.1} parent=1 // pred_region
      _
    $region13: #{net_forward.1} parent=1 // pred_fallthru
      _
    // Predicated region
    $region14: #{net_forward.1} parent=1 // pred_check
      _
    $region15: #{net_forward.1} parent=1 // pred_check_branch
      %20 = sbr.rel (0) target = $region17
    $region16: #{net_forward.1} parent=1 // pred_region
      _
    $region17: #{net_forward.1} parent=1 // pred_fallthru
      _
    // Predicated region
    $region18: #{net_forward.1} parent=1 // pred_check
      _
    $region19: #{net_forward.1} parent=1 // pred_check_branch
      %22 = sbr.rel (0) target = $region21
    $region20: #{net_forward.1} parent=1 // pred_region
      _
    $region21: #{net_forward.1} parent=1 // pred_fallthru
      _
    // Predicated region
    $region22: #{net_forward.1} parent=1 // pred_check
      _
    $region23: #{net_forward.1} parent=1 // pred_check_branch
      %24 = sbr.rel (0) target = $region25
    $region24: #{net_forward.1} parent=1 // pred_region
      _
    $region25: #{net_forward.1} parent=1 // pred_fallthru
      _
    // Predicated region
    $region26: #{net_forward.1} parent=1 // pred_check
      _
    $region27: #{net_forward.1} parent=1 // pred_check_branch
      %26 = sbr.rel (0) target = $region29
    $region28: #{net_forward.1} parent=1 // pred_region
      _
    $region29: #{net_forward.1} parent=1 // pred_fallthru
      _
    %v28 = vld [vmem:[%s0] sm:$0xff]
    %v29 = vld [vmem:[%s0 + $0x8] sm:$0xff]
    %v30 = vld [vmem:[%s0 + $0x10] sm:$0xff]
    %v31 = vld [vmem:[%s0 + $0x18] sm:$0xff]
    %v32 = vld [vmem:[%s0 + $0x20] sm:$0xff]
    %v33 = vld [vmem:[%s0 + $0x28] sm:$0xff]
    %v34 = vld [vmem:[%s0 + $0x30] sm:$0xff]
    %v35 = vpack.c.bf16 %v28, %v28
    %v36 = vpack.c.bf16 %v29, %v29
    %v37 = vpack.c.bf16 %v30, %v30
    %v38 = vpack.c.bf16 %v31, %v31
    %v39 = vpack.c.bf16 %v32, %v32
    %v40 = vpack.c.bf16 %v33, %v33
    %v41 = vpack.c.bf16 %v34, %v34
    %v42 = vld [vmem:[%s1] sm:$0xf]
    %v43 = vld [vmem:[%s1 + $0x4] sm:$0xf]
    %v44 = vld [vmem:[%s1 + $0x8] sm:$0xf]
    %v45 = vld [vmem:[%s1 + $0xc] sm:$0xf]
    %v46 = vld [vmem:[%s1 + $0x10] sm:$0xf]
    %v47 = vld [vmem:[%s1 + $0x14] sm:$0xf]
    %v48 = vld [vmem:[%s1 + $0x18] sm:$0xf]
    %v49 = vld [vmem:[%s1 + $0x1c] sm:$0xf]
    %v50 = vld [vmem:[%s1 + $0x20] sm:$0xf]
    %v51 = vld [vmem:[%s1 + $0x24] sm:$0xf]
    %v52 = vld [vmem:[%s1 + $0x28] sm:$0xf]
    %v53 = vld [vmem:[%s1 + $0x2c] sm:$0xf]
    %v54 = vld [vmem:[%s1 + $0x30] sm:$0xf]
    %v55 = vld [vmem:[%s1 + $0x34] sm:$0xf]
    %v56 = vld [vmem:[%s1 + $0x38] sm:$0xf]
    %v57 = vld [vmem:[%s1 + $0x3c] sm:$0xf]
    %v58 = vld [vmem:[%s1 + $0x40] sm:$0xf]
    %v59 = vld [vmem:[%s1 + $0x44] sm:$0xf]
    %v60 = vld [vmem:[%s1 + $0x48] sm:$0xf]
    %v61 = vld [vmem:[%s1 + $0x4c] sm:$0xf]
    %v62 = vld [vmem:[%s1 + $0x50] sm:$0xf]
    %v63 = vld [vmem:[%s1 + $0x54] sm:$0xf]
    %v64 = vld [vmem:[%s1 + $0x58] sm:$0xf]
    %v65 = vld [vmem:[%s1 + $0x5c] sm:$0xf]
    %v66 = vld [vmem:[%s1 + $0x60] sm:$0xf]
    %v67 = vld [vmem:[%s1 + $0x64] sm:$0xf]
    %v68 = vld [vmem:[%s1 + $0x68] sm:$0xf]
    %v69 = vld [vmem:[%s1 + $0x6c] sm:$0xf]
    %v70 = vld [vmem:[%s1 + $0x70] sm:$0xf]
    %v71 = vld [vmem:[%s1 + $0x74] sm:$0xf]
    %v72 = vld [vmem:[%s1 + $0x78] sm:$0xf]
    %v73 = vld [vmem:[%s1 + $0x7c] sm:$0xf]
    %v74 = vld [vmem:[%s1 + $0x80] sm:$0xf]
    %v75 = vld [vmem:[%s1 + $0x84] sm:$0xf]
    %v76 = vld [vmem:[%s1 + $0x88] sm:$0xf]
    %v77 = vld [vmem:[%s1 + $0x8c] sm:$0xf]
    %v78 = vld [vmem:[%s1 + $0x90] sm:$0xf]
    %v79 = vld [vmem:[%s1 + $0x94] sm:$0xf]
    %v80 = vld [vmem:[%s1 + $0x98] sm:$0xf]
    %v81 = vld [vmem:[%s1 + $0x9c] sm:$0xf]
    %v82 = vld [vmem:[%s1 + $0xa0] sm:$0xf]
    %v83 = vld [vmem:[%s1 + $0xa4] sm:$0xf]
    %v84 = vld [vmem:[%s1 + $0xa8] sm:$0xf]
    %v85 = vld [vmem:[%s1 + $0xac] sm:$0xf]
    %v86 = vld [vmem:[%s1 + $0xb0] sm:$0xf]
    %v87 = vld [vmem:[%s1 + $0xb4] sm:$0xf]
    %v88 = vld [vmem:[%s1 + $0xb8] sm:$0xf]
    %v89 = vld [vmem:[%s1 + $0xbc] sm:$0xf]
    %v90 = vld [vmem:[%s1 + $0xc0] sm:$0xf]
    %v91 = vld [vmem:[%s1 + $0xc4] sm:$0xf]
    %v92 = vld [vmem:[%s1 + $0xc8] sm:$0xf]
    %v93 = vld [vmem:[%s1 + $0xcc] sm:$0xf]
    %v94 = vld [vmem:[%s1 + $0xd0] sm:$0xf]
    %v95 = vld [vmem:[%s1 + $0xd4] sm:$0xf]
    %v96 = vld [vmem:[%s1 + $0xd8] sm:$0xf]
    %v97 = vld [vmem:[%s1 + $0xdc] sm:$0xf]
    %v98 = vld [vmem:[%s1 + $0xe0] sm:$0xf]
    %v99 = vld [vmem:[%s1 + $0xe4] sm:$0xf]
    %v100 = vld [vmem:[%s1 + $0xe8] sm:$0xf]
    %v101 = vld [vmem:[%s1 + $0xec] sm:$0xf]
    %v102 = vld [vmem:[%s1 + $0xf0] sm:$0xf]
    %v103 = vld [vmem:[%s1 + $0xf4] sm:$0xf]
    %v104 = vld [vmem:[%s1 + $0xf8] sm:$0xf]
    %v105 = vld [vmem:[%s1 + $0xfc] sm:$0xf]
    %v106 = vld [vmem:[%s1 + $0x100] sm:$0xf]
    %v107 = vld [vmem:[%s1 + $0x104] sm:$0xf]
    %v108 = vld [vmem:[%s1 + $0x108] sm:$0xf]
    %v109 = vld [vmem:[%s1 + $0x10c] sm:$0xf]
    %v110 = vld [vmem:[%s1 + $0x110] sm:$0xf]
    %v111 = vld [vmem:[%s1 + $0x114] sm:$0xf]
    %v112 = vld [vmem:[%s1 + $0x118] sm:$0xf]
    %v113 = vld [vmem:[%s1 + $0x11c] sm:$0xf]
    %v114 = vld [vmem:[%s1 + $0x120] sm:$0xf]
    %v115 = vld [vmem:[%s1 + $0x124] sm:$0xf]
    %v116 = vld [vmem:[%s1 + $0x128] sm:$0xf]
    %v117 = vld [vmem:[%s1 + $0x12c] sm:$0xf]
    %v118 = vld [vmem:[%s1 + $0x130] sm:$0xf]
    %v119 = vld [vmem:[%s1 + $0x134] sm:$0xf]
    %v120 = vld [vmem:[%s1 + $0x138] sm:$0xf]
    %v121 = vld [vmem:[%s1 + $0x13c] sm:$0xf]
    %v122 = vld [vmem:[%s1 + $0x140] sm:$0xf]
    %v123 = vld [vmem:[%s1 + $0x144] sm:$0xf]
    %v124 = vld [vmem:[%s1 + $0x148] sm:$0xf]
    %v125 = vld [vmem:[%s1 + $0x14c] sm:$0xf]
    %v126 = vld [vmem:[%s1 + $0x150] sm:$0xf]
    %v127 = vld [vmem:[%s1 + $0x154] sm:$0xf]
    %v128 = vld [vmem:[%s1 + $0x158] sm:$0xf]
    %v129 = vld [vmem:[%s1 + $0x15c] sm:$0xf]
    %v130 = vld [vmem:[%s1 + $0x160] sm:$0xf]
    %v131 = vld [vmem:[%s1 + $0x164] sm:$0xf]
    %v132 = vld [vmem:[%s1 + $0x168] sm:$0xf]
    %v133 = vld [vmem:[%s1 + $0x16c] sm:$0xf]
    %v134 = vld [vmem:[%s1 + $0x170] sm:$0xf]
    %v135 = vld [vmem:[%s1 + $0x174] sm:$0xf]
    %v136 = vld [vmem:[%s1 + $0x178] sm:$0xf]
    %v137 = vld [vmem:[%s1 + $0x17c] sm:$0xf]
    %v138 = vld [vmem:[%s1 + $0x180] sm:$0xf]
    %v139 = vld [vmem:[%s1 + $0x184] sm:$0xf]
    %v140 = vld [vmem:[%s2] sm:$0x1]
    %v142 = vlaneseq
    %v143 = vshrl.u32 %v142, 7
    %v144 = vsub.s32 0, %v143
    %v145 = vrot.slane %v140, %v144
    %v245 = vunpack.c.l.b16 %v42
    %v246 = vunpack.c.l.b16 %v43
    %v247 = vunpack.c.l.b16 %v44
    %v248 = vunpack.c.l.b16 %v45
    %v249 = vunpack.c.l.b16 %v46
    %v250 = vunpack.c.l.b16 %v47
    %v251 = vunpack.c.l.b16 %v48
    %v252 = vunpack.c.l.b16 %v49
    %v253 = vunpack.c.l.b16 %v50
    %v254 = vunpack.c.l.b16 %v51
    %v255 = vunpack.c.l.b16 %v52
    %v256 = vunpack.c.l.b16 %v53
    %v257 = vunpack.c.l.b16 %v54
    %v258 = vunpack.c.l.b16 %v55
    %v259 = vunpack.c.l.b16 %v56
    %v260 = vunpack.c.l.b16 %v57
    %v261 = vunpack.c.l.b16 %v58
    %v262 = vunpack.c.l.b16 %v59
    %v263 = vunpack.c.l.b16 %v60
    %v264 = vunpack.c.l.b16 %v61
    %v265 = vunpack.c.l.b16 %v62
    %v266 = vunpack.c.l.b16 %v63
    %v267 = vunpack.c.l.b16 %v64
    %v268 = vunpack.c.l.b16 %v65
    %v269 = vunpack.c.l.b16 %v66
    %v270 = vunpack.c.l.b16 %v67
    %v271 = vunpack.c.l.b16 %v68
    %v272 = vunpack.c.l.b16 %v69
    %v273 = vunpack.c.l.b16 %v70
    %v274 = vunpack.c.l.b16 %v71
    %v275 = vunpack.c.l.b16 %v72
    %v276 = vunpack.c.l.b16 %v73
    %v277 = vunpack.c.l.b16 %v74
    %v278 = vunpack.c.l.b16 %v75
    %v279 = vunpack.c.l.b16 %v76
    %v280 = vunpack.c.l.b16 %v77
    %v281 = vunpack.c.l.b16 %v78
    %v282 = vunpack.c.l.b16 %v79
    %v283 = vunpack.c.l.b16 %v80
    %v284 = vunpack.c.l.b16 %v81
    %v285 = vunpack.c.l.b16 %v82
    %v286 = vunpack.c.l.b16 %v83
    %v287 = vunpack.c.l.b16 %v84
    %v288 = vunpack.c.l.b16 %v85
    %v289 = vunpack.c.l.b16 %v86
    %v290 = vunpack.c.l.b16 %v87
    %v291 = vunpack.c.l.b16 %v88
    %v292 = vunpack.c.l.b16 %v89
    %v293 = vunpack.c.l.b16 %v90
    %v294 = vunpack.c.l.b16 %v91
    %v295 = vunpack.c.l.b16 %v92
    %v296 = vunpack.c.l.b16 %v93
    %v297 = vunpack.c.l.b16 %v94
    %v298 = vunpack.c.l.b16 %v95
    %v299 = vunpack.c.l.b16 %v96
    %v300 = vunpack.c.l.b16 %v97
    %v301 = vunpack.c.l.b16 %v98
    %v302 = vunpack.c.l.b16 %v99
    %v303 = vunpack.c.l.b16 %v100
    %v304 = vunpack.c.l.b16 %v101
    %v305 = vunpack.c.l.b16 %v102
    %v306 = vunpack.c.l.b16 %v103
    %v307 = vunpack.c.l.b16 %v104
    %v308 = vunpack.c.l.b16 %v105
    %v309 = vunpack.c.l.b16 %v106
    %v310 = vunpack.c.l.b16 %v107
    %v311 = vunpack.c.l.b16 %v108
    %v312 = vunpack.c.l.b16 %v109
    %v313 = vunpack.c.l.b16 %v110
    %v314 = vunpack.c.l.b16 %v111
    %v315 = vunpack.c.l.b16 %v112
    %v316 = vunpack.c.l.b16 %v113
    %v317 = vunpack.c.l.b16 %v114
    %v318 = vunpack.c.l.b16 %v115
    %v319 = vunpack.c.l.b16 %v116
    %v320 = vunpack.c.l.b16 %v117
    %v321 = vunpack.c.l.b16 %v118
    %v322 = vunpack.c.l.b16 %v119
    %v323 = vunpack.c.l.b16 %v120
    %v324 = vunpack.c.l.b16 %v121
    %v325 = vunpack.c.l.b16 %v122
    %v326 = vunpack.c.l.b16 %v123
    %v327 = vunpack.c.l.b16 %v124
    %v328 = vunpack.c.l.b16 %v125
    %v329 = vunpack.c.l.b16 %v126
    %v330 = vunpack.c.l.b16 %v127
    %v331 = vunpack.c.l.b16 %v128
    %v332 = vunpack.c.l.b16 %v129
    %v333 = vunpack.c.l.b16 %v130
    %v334 = vunpack.c.l.b16 %v131
    %v335 = vunpack.c.l.b16 %v132
    %v336 = vunpack.c.l.b16 %v133
    %v337 = vunpack.c.l.b16 %v134
    %v338 = vunpack.c.l.b16 %v135
    %v339 = vunpack.c.l.b16 %v136
    %v340 = vunpack.c.l.b16 %v137
    %v341 = vunpack.c.l.b16 %v138
    %v342 = vunpack.c.l.b16 %v139
    %v343 = vpack.c.b16 %v246, %v245
    %v344 = vpack.c.b16 %v248, %v247
    %v345 = vpack.c.b16 %v250, %v249
    %v346 = vpack.c.b16 %v252, %v251
    %v347 = vpack.c.b16 %v254, %v253
    %v348 = vpack.c.b16 %v256, %v255
    %v349 = vpack.c.b16 %v258, %v257
    %v350 = vpack.c.b16 %v260, %v259
    %v351 = vpack.c.b16 %v262, %v261
    %v352 = vpack.c.b16 %v264, %v263
    %v353 = vpack.c.b16 %v266, %v265
    %v354 = vpack.c.b16 %v268, %v267
    %v355 = vpack.c.b16 %v270, %v269
    %v356 = vpack.c.b16 %v272, %v271
    %v357 = vpack.c.b16 %v274, %v273
    %v358 = vpack.c.b16 %v276, %v275
    %v359 = vpack.c.b16 %v278, %v277
    %v360 = vpack.c.b16 %v280, %v279
    %v361 = vpack.c.b16 %v282, %v281
    %v362 = vpack.c.b16 %v284, %v283
    %v363 = vpack.c.b16 %v286, %v285
    %v364 = vpack.c.b16 %v288, %v287
    %v365 = vpack.c.b16 %v290, %v289
    %v366 = vpack.c.b16 %v292, %v291
    %v367 = vpack.c.b16 %v294, %v293
    %v368 = vpack.c.b16 %v296, %v295
    %v369 = vpack.c.b16 %v298, %v297
    %v370 = vpack.c.b16 %v300, %v299
    %v371 = vpack.c.b16 %v302, %v301
    %v372 = vpack.c.b16 %v304, %v303
    %v373 = vpack.c.b16 %v306, %v305
    %v374 = vpack.c.b16 %v308, %v307
    %v375 = vpack.c.b16 %v310, %v309
    %v376 = vpack.c.b16 %v312, %v311
    %v377 = vpack.c.b16 %v314, %v313
    %v378 = vpack.c.b16 %v316, %v315
    %v379 = vpack.c.b16 %v318, %v317
    %v380 = vpack.c.b16 %v320, %v319
    %v381 = vpack.c.b16 %v322, %v321
    %v382 = vpack.c.b16 %v324, %v323
    %v383 = vpack.c.b16 %v326, %v325
    %v384 = vpack.c.b16 %v328, %v327
    %v385 = vpack.c.b16 %v330, %v329
    %v386 = vpack.c.b16 %v332, %v331
    %v387 = vpack.c.b16 %v334, %v333
    %v388 = vpack.c.b16 %v336, %v335
    %v389 = vpack.c.b16 %v338, %v337
    %v390 = vpack.c.b16 %v340, %v339
    %v391 = vpack.c.b16 %v342, %v341
    %vm441 = vcmask 130048
    %v443 = vsel %vm441, %v41, 0
    %445 = vmatprep.subr.bf16.mxu0 0
    %446 = vmatpush1.bf16.msra.mxu0 %v350
    %447 = vmatprep.subr.bf16.mxu0 0
    %448 = vmatpush1.bf16.msra.mxu0 %v349
    %449 = vmatprep.subr.bf16.mxu0 0
    %450 = vmatpush1.bf16.msra.mxu0 %v348
    %451 = vmatprep.subr.bf16.mxu0 0
    %452 = vmatpush1.bf16.msra.mxu0 %v347
    %453 = vmatprep.subr.bf16.mxu0 0
    %454 = vmatpush1.bf16.msra.mxu0 %v346
    %455 = vmatprep.subr.bf16.mxu0 0
    %456 = vmatpush1.bf16.msra.mxu0 %v345
    %457 = vmatprep.subr.bf16.mxu0 0
    %458 = vmatpush1.bf16.msra.mxu0 %v344
    %459 = vmatprep.subr.bf16.mxu0 0
    %460 = vmatpush1.bf16.msra.mxu0 %v343
    %461 = vmatprep.subr.bf16.mxu0 0
    %462 = vmatpush2.bf16.msra.mxu0 %v358
    %463 = vmatprep.subr.bf16.mxu0 0
    %464 = vmatpush2.bf16.msra.mxu0 %v357
    %465 = vmatprep.subr.bf16.mxu0 0
    %466 = vmatpush2.bf16.msra.mxu0 %v356
    %467 = vmatprep.subr.bf16.mxu0 0
    %468 = vmatpush2.bf16.msra.mxu0 %v355
    %469 = vmatprep.subr.bf16.mxu0 0
    %470 = vmatpush2.bf16.msra.mxu0 %v354
    %471 = vmatprep.subr.bf16.mxu0 0
    %472 = vmatpush2.bf16.msra.mxu0 %v353
    %473 = vmatprep.subr.bf16.mxu0 0
    %474 = vmatpush2.bf16.msra.mxu0 %v352
    %475 = vmatprep.subr.bf16.mxu0 0
    %476 = vmatpush2.bf16.msra.mxu0 %v351
    %477 = vmatprep.mubr.bf16.mxu0 %v36
    %478 = vmatmul.mubr.bf16.gmra.mxu0 %v35
    %v479 = vpop.f32.mrf.mxu0
    %v480 = vadd.f32 %v145, %v479
    %v481 = vpop.f32.mrf.mxu0
    %v482 = vpop.f32.mrf.mxu0
    %v483 = vpop.f32.mrf.mxu0
    %484 = vdwg.mxu0
    %485 = vmatprep.subr.bf16.mxu0 0
    %486 = vmatpush1.bf16.msra.mxu0 %v366
    %487 = vmatprep.subr.bf16.mxu0 0
    %488 = vmatpush1.bf16.msra.mxu0 %v365
    %489 = vmatprep.subr.bf16.mxu0 0
    %490 = vmatpush1.bf16.msra.mxu0 %v364
    %491 = vmatprep.subr.bf16.mxu0 0
    %492 = vmatpush1.bf16.msra.mxu0 %v363
    %493 = vmatprep.subr.bf16.mxu0 0
    %494 = vmatpush1.bf16.msra.mxu0 %v362
    %495 = vmatprep.subr.bf16.mxu0 0
    %496 = vmatpush1.bf16.msra.mxu0 %v361
    %497 = vmatprep.subr.bf16.mxu0 0
    %498 = vmatpush1.bf16.msra.mxu0 %v360
    %499 = vmatprep.subr.bf16.mxu0 0
    %500 = vmatpush1.bf16.msra.mxu0 %v359
    %501 = vmatprep.subr.bf16.mxu0 0
    %502 = vmatpush2.bf16.msra.mxu0 %v374
    %503 = vmatprep.subr.bf16.mxu0 0
    %504 = vmatpush2.bf16.msra.mxu0 %v373
    %505 = vmatprep.subr.bf16.mxu0 0
    %506 = vmatpush2.bf16.msra.mxu0 %v372
    %507 = vmatprep.subr.bf16.mxu0 0
    %508 = vmatpush2.bf16.msra.mxu0 %v371
    %509 = vmatprep.subr.bf16.mxu0 0
    %510 = vmatpush2.bf16.msra.mxu0 %v370
    %511 = vmatprep.subr.bf16.mxu0 0
    %512 = vmatpush2.bf16.msra.mxu0 %v369
    %513 = vmatprep.subr.bf16.mxu0 0
    %514 = vmatpush2.bf16.msra.mxu0 %v368
    %515 = vmatprep.subr.bf16.mxu0 0
    %516 = vmatpush2.bf16.msra.mxu0 %v367
    %517 = vmatprep.mubr.bf16.mxu0 %v38
    %518 = vmatmul.mubr.bf16.gmra.mxu0 %v37
    %v519 = vpop.f32.mrf.mxu0
    %v520 = vadd.f32 %v480, %v519
    %v521 = vpop.f32.mrf.mxu0
    %v522 = vpop.f32.mrf.mxu0
    %v523 = vpop.f32.mrf.mxu0
    %524 = vdwg.mxu0
    %525 = vmatprep.subr.bf16.mxu0 0
    %526 = vmatpush1.bf16.msra.mxu0 %v382
    %527 = vmatprep.subr.bf16.mxu0 0
    %528 = vmatpush1.bf16.msra.mxu0 %v381
    %529 = vmatprep.subr.bf16.mxu0 0
    %530 = vmatpush1.bf16.msra.mxu0 %v380
    %531 = vmatprep.subr.bf16.mxu0 0
    %532 = vmatpush1.bf16.msra.mxu0 %v379
    %533 = vmatprep.subr.bf16.mxu0 0
    %534 = vmatpush1.bf16.msra.mxu0 %v378
    %535 = vmatprep.subr.bf16.mxu0 0
    %536 = vmatpush1.bf16.msra.mxu0 %v377
    %537 = vmatprep.subr.bf16.mxu0 0
    %538 = vmatpush1.bf16.msra.mxu0 %v376
    %539 = vmatprep.subr.bf16.mxu0 0
    %540 = vmatpush1.bf16.msra.mxu0 %v375
    %541 = vmatprep.subr.bf16.mxu0 0
    %542 = vmatpush2.bf16.msra.mxu0 %v390
    %543 = vmatprep.subr.bf16.mxu0 0
    %544 = vmatpush2.bf16.msra.mxu0 %v389
    %545 = vmatprep.subr.bf16.mxu0 0
    %546 = vmatpush2.bf16.msra.mxu0 %v388
    %547 = vmatprep.subr.bf16.mxu0 0
    %548 = vmatpush2.bf16.msra.mxu0 %v387
    %549 = vmatprep.subr.bf16.mxu0 0
    %550 = vmatpush2.bf16.msra.mxu0 %v386
    %551 = vmatprep.subr.bf16.mxu0 0
    %552 = vmatpush2.bf16.msra.mxu0 %v385
    %553 = vmatprep.subr.bf16.mxu0 0
    %554 = vmatpush2.bf16.msra.mxu0 %v384
    %555 = vmatprep.subr.bf16.mxu0 0
    %556 = vmatpush2.bf16.msra.mxu0 %v383
    %557 = vmatprep.mubr.bf16.mxu0 %v40
    %558 = vmatmul.mubr.bf16.gmra.mxu0 %v39
    %v559 = vpop.f32.mrf.mxu0
    %v560 = vadd.f32 %v520, %v559
    %v561 = vpop.f32.mrf.mxu0
    %v562 = vpop.f32.mrf.mxu0
    %v563 = vpop.f32.mrf.mxu0
    %564 = vdwg.mxu0
    %565 = vmatprep.subr.bf16.mxu0 0
    %566 = vmatpush1.bf16.msra.mxu0 0
    %567 = vmatprep.subr.bf16.mxu0 0
    %568 = vmatpush1.bf16.msra.mxu0 0
    %569 = vmatprep.subr.bf16.mxu0 0
    %570 = vmatpush1.bf16.msra.mxu0 0
    %571 = vmatprep.subr.bf16.mxu0 0
    %572 = vmatpush1.bf16.msra.mxu0 0
    %573 = vmatprep.subr.bf16.mxu0 0
    %574 = vmatpush1.bf16.msra.mxu0 0
    %575 = vmatprep.subr.bf16.mxu0 0
    %576 = vmatpush1.bf16.msra.mxu0 0
    %577 = vmatprep.subr.bf16.mxu0 0
    %578 = vmatpush1.bf16.msra.mxu0 0
    %579 = vmatprep.subr.bf16.mxu0 0
    %580 = vmatpush1.bf16.msra.mxu0 %v391
    %581 = vmatprep.subr.bf16.mxu0 0
    %582 = vmatpush2.bf16.msra.mxu0 0
    %583 = vmatprep.subr.bf16.mxu0 0
    %584 = vmatpush2.bf16.msra.mxu0 0
    %585 = vmatprep.subr.bf16.mxu0 0
    %586 = vmatpush2.bf16.msra.mxu0 0
    %587 = vmatprep.subr.bf16.mxu0 0
    %588 = vmatpush2.bf16.msra.mxu0 0
    %589 = vmatprep.subr.bf16.mxu0 0
    %590 = vmatpush2.bf16.msra.mxu0 0
    %591 = vmatprep.subr.bf16.mxu0 0
    %592 = vmatpush2.bf16.msra.mxu0 0
    %593 = vmatprep.subr.bf16.mxu0 0
    %594 = vmatpush2.bf16.msra.mxu0 0
    %595 = vmatprep.subr.bf16.mxu0 0
    %596 = vmatpush2.bf16.msra.mxu0 0
    %597 = vmatprep.mubr.bf16.mxu0 0
    %598 = vmatmul.mubr.bf16.gmra.mxu0 %v443
    %v599 = vpop.f32.mrf.mxu0
    %v600 = vadd.f32 %v560, %v599
    %v601 = vpop.f32.mrf.mxu0
    %v602 = vpop.f32.mrf.mxu0
    %v603 = vpop.f32.mrf.mxu0
    %604 = vdwg.mxu0
    %v605 = vmax.f32 %v600, 0.0
    %v606 = vpack.c.bf16 %v605, %v605
    %v607 = vld [vmem:[%s3] sm:$0xf]
    %v608 = vld [vmem:[%s3 + $0x4] sm:$0xf]
    %v609 = vld [vmem:[%s3 + $0x8] sm:$0xf]
    %v610 = vld [vmem:[%s3 + $0xc] sm:$0xf]
    %v611 = vld [vmem:[%s3 + $0x10] sm:$0xf]
    %v612 = vld [vmem:[%s4] sm:$0x1]
    %v614 = vlaneseq
    %v615 = vshrl.u32 %v614, 7
    %v616 = vsub.s32 0, %v615
    %v617 = vrot.slane %v612, %v616
    %v624 = vunpack.c.l.b16 %v607
    %v625 = vunpack.c.l.b16 %v608
    %v626 = vunpack.c.l.b16 %v609
    %v627 = vunpack.c.l.b16 %v610
    %v628 = vunpack.c.l.b16 %v611
    %v629 = vpack.c.b16 %v625, %v624
    %v630 = vpack.c.b16 %v627, %v626
    %v631 = vpack.c.b16 %v628, %v628
    %vm634 = vcmask 326656
    %v636 = vsel %vm634, %v606, 0
    %vm638 = vcmask 1043456
    %v640 = vsel %vm638, %v631, 0
    %642 = vmatprep.subr.bf16.mxu0 0
    %643 = vmatpush1.bf16.msra.mxu0 0
    %644 = vmatprep.subr.bf16.mxu0 0
    %645 = vmatpush1.bf16.msra.mxu0 0
    %646 = vmatprep.subr.bf16.mxu0 0
    %647 = vmatpush1.bf16.msra.mxu0 0
    %648 = vmatprep.subr.bf16.mxu0 0
    %649 = vmatpush1.bf16.msra.mxu0 0
    %650 = vmatprep.subr.bf16.mxu0 0
    %651 = vmatpush1.bf16.msra.mxu0 0
    %652 = vmatprep.subr.bf16.mxu0 0
    %653 = vmatpush1.bf16.msra.mxu0 %v640
    %654 = vmatprep.subr.bf16.mxu0 0
    %655 = vmatpush1.bf16.msra.mxu0 %v630
    %656 = vmatprep.subr.bf16.mxu0 0
    %657 = vmatpush1.bf16.msra.mxu0 %v629
    %658 = vmatprep.subr.bf16.mxu0 0
    %659 = vmatpush2.bf16.msra.mxu0 0
    %660 = vmatprep.subr.bf16.mxu0 0
    %661 = vmatpush2.bf16.msra.mxu0 0
    %662 = vmatprep.subr.bf16.mxu0 0
    %663 = vmatpush2.bf16.msra.mxu0 0
    %664 = vmatprep.subr.bf16.mxu0 0
    %665 = vmatpush2.bf16.msra.mxu0 0
    %666 = vmatprep.subr.bf16.mxu0 0
    %667 = vmatpush2.bf16.msra.mxu0 0
    %668 = vmatprep.subr.bf16.mxu0 0
    %669 = vmatpush2.bf16.msra.mxu0 0
    %670 = vmatprep.subr.bf16.mxu0 0
    %671 = vmatpush2.bf16.msra.mxu0 0
    %672 = vmatprep.subr.bf16.mxu0 0
    %673 = vmatpush2.bf16.msra.mxu0 0
    %674 = vmatprep.mubr.bf16.mxu0 0
    %675 = vmatmul.mubr.bf16.gmra.mxu0 %v636
    %v676 = vpop.f32.mrf.mxu0
    %v677 = vadd.f32 %v617, %v676
    %v678 = vpop.f32.mrf.mxu0
    %v679 = vpop.f32.mrf.mxu0
    %v680 = vpop.f32.mrf.mxu0
    %681 = vdwg.mxu0
    %v682 = vmax.f32 %v677, 0.0
    %v683 = vpack.c.bf16 %v682, %v682
    %v684 = vld [vmem:[%s5] sm:$0xf]
    %v685 = vld [vmem:[%s5 + $0x4] sm:$0xf]
    %v686 = vld [vmem:[%s5 + $0x8] sm:$0xf]
    %v687 = vld [vmem:[%s5 + $0xc] sm:$0x7]
    %v688 = vld [vmem:[%s6] sm:$0x1]
    %v690 = vlaneseq
    %v691 = vshrl.u32 %v690, 7
    %v692 = vsub.s32 0, %v691
    %v693 = vrot.slane %v688, %v692
    %v699 = vunpack.c.l.b16 %v684
    %v700 = vunpack.c.l.b16 %v685
    %v701 = vunpack.c.l.b16 %v686
    %v702 = vunpack.c.l.b16 %v687
    %v703 = vpack.c.b16 %v700, %v699
    %v704 = vpack.c.b16 %v702, %v701
    %vm706 = vcmask 244736
    %v708 = vsel %vm706, %v683, 0
    %vm710 = vcmask 1046528
    %v712 = vsel %vm710, %v704, 0
    %714 = vmatprep.subr.bf16.mxu0 0
    %715 = vmatpush1.bf16.msra.mxu0 0
    %716 = vmatprep.subr.bf16.mxu0 0
    %717 = vmatpush1.bf16.msra.mxu0 0
    %718 = vmatprep.subr.bf16.mxu0 0
    %719 = vmatpush1.bf16.msra.mxu0 0
    %720 = vmatprep.subr.bf16.mxu0 0
    %721 = vmatpush1.bf16.msra.mxu0 0
    %722 = vmatprep.subr.bf16.mxu0 0
    %723 = vmatpush1.bf16.msra.mxu0 0
    %724 = vmatprep.subr.bf16.mxu0 0
    %725 = vmatpush1.bf16.msra.mxu0 0
    %726 = vmatprep.subr.bf16.mxu0 0
    %727 = vmatpush1.bf16.msra.mxu0 %v712
    %728 = vmatprep.subr.bf16.mxu0 0
    %729 = vmatpush1.bf16.msra.mxu0 %v703
    %730 = vmatprep.subr.bf16.mxu0 0
    %731 = vmatpush2.bf16.msra.mxu0 0
    %732 = vmatprep.subr.bf16.mxu0 0
    %733 = vmatpush2.bf16.msra.mxu0 0
    %734 = vmatprep.subr.bf16.mxu0 0
    %735 = vmatpush2.bf16.msra.mxu0 0
    %736 = vmatprep.subr.bf16.mxu0 0
    %737 = vmatpush2.bf16.msra.mxu0 0
    %738 = vmatprep.subr.bf16.mxu0 0
    %739 = vmatpush2.bf16.msra.mxu0 0
    %740 = vmatprep.subr.bf16.mxu0 0
    %741 = vmatpush2.bf16.msra.mxu0 0
    %742 = vmatprep.subr.bf16.mxu0 0
    %743 = vmatpush2.bf16.msra.mxu0 0
    %744 = vmatprep.subr.bf16.mxu0 0
    %745 = vmatpush2.bf16.msra.mxu0 0
    %746 = vmatprep.mubr.bf16.mxu0 0
    %747 = vmatmul.mubr.bf16.gmra.mxu0 %v708
    %v748 = vpop.f32.mrf.mxu0
    %v749 = vadd.f32 %v693, %v748
    %v750 = vpop.f32.mrf.mxu0
    %v751 = vpop.f32.mrf.mxu0
    %v752 = vpop.f32.mrf.mxu0
    %753 = vdwg.mxu0
    %vm754 = vcmask 80896
    %v755 = vsel %vm754, %v749, -inf
    %756 = vmax.xlane.f32.xlu0 %v755
    %v757 = vpop.xlane.xlu0 %756
    %v758 = vsub.f32 %v749, %v757
    %v759 = vmul.f32 %v758, 1.442695
    %v760 = vpow.pop %v759
    %v761 = vsel %vm754, %v760, 0.0
    %762 = vadd.xlane.f32.xlu0 %v761
    %v763 = vpop.xlane.xlu0 %762
    %v764 = vrcp.pop %v763
    %v765 = vmul.f32 %v760, %v764
    %766 = vst.msk [vmem:[#allocation2] sm:$0xff] %vm754, %v765
    // Predicated region
    $region30: #{net_forward.1} parent=1 // pred_check
      _
    $region31: #{net_forward.1} parent=1 // pred_check_branch
      %768 = sbr.rel (0) target = $region33
    $region32: #{net_forward.1} parent=1 // pred_region
      %s770 = ssub.s32 128, 128
      %771 = vsyncadd [#allocation3], %s770
      %s773 = sshll.u32 [#allocation2], 4
      %s774 = int_to_ptr.vmem [resolvable:$true] %s773
      %776 = dma.vmem_to_hbm [thread:$0]  %s774, 128, %s7, [#allocation3]
    $region33: #{net_forward.1} parent=1 // pred_fallthru
      _
    // Predicated region
    $region34: #{net_forward.1} parent=1 // pred_check
      _
    $region35: #{net_forward.1} parent=1 // pred_check_branch
      %778 = sbr.rel (0) target = $region37
    $region36: #{net_forward.1} parent=1 // pred_region
      %779 = dma.done [#allocation3], 128
    $region37: #{net_forward.1} parent=1 // pred_fallthru
      _
    %780 = vsyncpa [#allocation3], 1

</llo_original>
